<compile_context>
chip_gen: v7x
topology: tpu7x:2x2x1
jax: 0.10.0
libtpu: 0.0.40
codegen_flags: <defaults>
</compile_context>

<pallas_src>
import functools

import jax
import jax.numpy as jnp
from jax.experimental import pallas as pl
from jax.experimental.pallas import tpu as pltpu


def _round_up(x, m):
    return (x + m - 1) // m * m


# ----------------------------------------------------------------------------
# Path A kernel: resident W/b, one (tm, N) output tile per grid point.
# ----------------------------------------------------------------------------
def _linear_kernel(x_ref, w_ref, b_ref, o_ref):
    # x: (tm, D)   W: (D, N)   b: (1, N)   o: (tm, N)
    acc = jnp.dot(x_ref[...], w_ref[...], preferred_element_type=jnp.float32)
    o_ref[...] = (acc + b_ref[...]).astype(o_ref.dtype)


# ----------------------------------------------------------------------------
# Path B kernel: K-tiled reduction with an f32 VMEM accumulator (large embed_dim).
# ----------------------------------------------------------------------------
def _linear_kernel_ktiled(x_ref, w_ref, b_ref, o_ref, acc_ref):
    k = pl.program_id(1)

    @pl.when(k == 0)
    def _():
        acc_ref[...] = jnp.zeros_like(acc_ref)

    acc_ref[...] += jnp.dot(x_ref[...], w_ref[...],
                            preferred_element_type=jnp.float32)

    @pl.when(k == pl.num_programs(1) - 1)
    def _():
        o_ref[...] = (acc_ref[...] + b_ref[...]).astype(o_ref.dtype)


def _linear_pallas(x2, w, b, *, k_tile=None):
    """x2: (M, D), w: (D, N), b: (N,)  ->  (M, N) via a single fused kernel."""
    M, D = x2.shape
    N = w.shape[1]
    dtype = x2.dtype
    itemsize = jnp.dtype(dtype).itemsize

    # M tile: sublane-aligned, >= 2 blocks when M > 8 (two v7x TensorCores),
    # capped at 512 (large tiles amortize the ~0.35us per-step overhead).
    tm = min(_round_up(max(pl.cdiv(M, 2), 8), 8), 512)
    m_tiles = pl.cdiv(M, tm)
    b2 = b.reshape(1, N)

    # Conservative VMEM estimate (everything double-buffered) for path A.
    vmem_est = 2 * (tm * D + D * N + N + tm * N) * itemsize

    if k_tile is None and vmem_est <= 24 * 1024 * 1024:
        # -------- Path A: resident weight/bias, 1-D grid over M tiles. --------
        cost = pl.CostEstimate(
            flops=2 * M * D * N,
            transcendentals=0,
            bytes_accessed=(M * D + D * N + N + M * N) * itemsize,
        )
        return pl.pallas_call(
            _linear_kernel,
            out_shape=jax.ShapeDtypeStruct((M, N), dtype),
            grid=(m_tiles,),
            in_specs=[
                pl.BlockSpec((tm, D), lambda i: (i, 0)),
                pl.BlockSpec((D, N), lambda i: (0, 0)),   # resident weight
                pl.BlockSpec((1, N), lambda i: (0, 0)),   # resident bias
            ],
            out_specs=pl.BlockSpec((tm, N), lambda i: (i, 0)),
            compiler_params=pltpu.CompilerParams(
                dimension_semantics=("parallel",),
                vmem_limit_bytes=int(min(max(vmem_est + (4 << 20), 32 << 20),
                                         64 << 20)),
            ),
            cost_estimate=cost,
        )(x2, w, b2)

    # -------- Path B: K-tiled fallback for very large embed_dim (VMEM guard). --
    tk = k_tile if k_tile is not None else 512
    Dp = _round_up(D, tk)
    if Dp != D:
        # Zero padding along K is numerically exact (contributes nothing).
        x2 = jnp.pad(x2, ((0, 0), (0, Dp - D)))
        w = jnp.pad(w, ((0, Dp - D), (0, 0)))
    k_tiles = Dp // tk

    cost = pl.CostEstimate(
        flops=2 * M * Dp * N,
        transcendentals=0,
        bytes_accessed=(M * Dp + Dp * N + N + M * N) * itemsize,
    )
    return pl.pallas_call(
        _linear_kernel_ktiled,
        out_shape=jax.ShapeDtypeStruct((M, N), dtype),
        grid=(m_tiles, k_tiles),
        in_specs=[
            pl.BlockSpec((tm, tk), lambda i, k: (i, k)),
            pl.BlockSpec((tk, N), lambda i, k: (k, 0)),
            pl.BlockSpec((1, N), lambda i, k: (0, 0)),    # resident bias
        ],
        out_specs=pl.BlockSpec((tm, N), lambda i, k: (i, 0)),
        scratch_shapes=[pltpu.VMEM((tm, N), jnp.float32)],
        compiler_params=pltpu.CompilerParams(
            dimension_semantics=("parallel", "arbitrary"),
            vmem_limit_bytes=48 << 20,
        ),
        cost_estimate=cost,
    )(x2, w, b2)


# ----------------------------------------------------------------------------
# Parameter construction (PyTorch nn.Linear-style uniform init)
# ----------------------------------------------------------------------------
def init_linear_patch_decoder(key, embed_dim, patch_size, num_channels,
                              dtype=jnp.float32):
    out_dim = patch_size * patch_size * num_channels
    kw, kb = jax.random.split(key)
    bound = 1.0 / jnp.sqrt(embed_dim)
    w = jax.random.uniform(kw, (embed_dim, out_dim), dtype, -bound, bound)
    b = jax.random.uniform(kb, (out_dim,), dtype, -bound, bound)
    return {"w": w, "b": b}


# ----------------------------------------------------------------------------
# Forward pass matching LinearPatchDecoder.forward
# ----------------------------------------------------------------------------
@functools.partial(jax.jit, static_argnums=(2, 3))
def linear_patch_decoder_forward(params, x, patch_size, num_channels):
    # x: (..., embed_dim) — flatten leading dims (torch's batched Linear
    # followed by .view(-1, C, P, P)); the final reshape is pure layout glue.
    D = x.shape[-1]
    x2 = x.reshape(-1, D)
    y = _linear_pallas(x2, params["w"], params["b"])        # (M, P*P*C)
    return y.reshape(-1, num_channels, patch_size, patch_size)


# Pure-JAX reference for correctness checking.
def _reference_forward(params, x, patch_size, num_channels):
    D = x.shape[-1]
    y = x.reshape(-1, D) @ params["w"] + params["b"]
    return y.reshape(-1, num_channels, patch_size, patch_size)


if __name__ == "__main__":
    key = jax.random.PRNGKey(0)
    k_param, k_x = jax.random.split(key)

    # Small, module-consistent shapes.
    B, S = 2, 8               # batch, tokens (patches) — flattened by .view(-1,...)
    embed_dim = 128           # image_model.embed_dim
    patch_size = 16
    num_channels = 1

    x = jax.random.normal(k_x, (B, S, embed_dim), jnp.float32)
    params = init_linear_patch_decoder(k_param, embed_dim, patch_size, num_channels)

    out = linear_patch_decoder_forward(params, x, patch_size, num_channels)
    jax.block_until_ready(out)

    ref = _reference_forward(params, x, patch_size, num_channels)
    assert out.shape == (B * S, num_channels, patch_size, patch_size), out.shape
    assert out.shape == ref.shape
    assert jnp.allclose(out, ref, atol=1e-4, rtol=1e-4)

    # Also exercise the K-tiled fallback (used automatically for very large
    # embed_dim) at a small forced tile: ragged M, two K steps.
    k2 = jax.random.PRNGKey(1)
    ka, kbk, kc = jax.random.split(k2, 3)
    Mrows, Dbig, Nout = 20, 256, 256
    xb = jax.random.normal(ka, (Mrows, Dbig), jnp.float32)
    wb = jax.random.normal(kbk, (Dbig, Nout), jnp.float32) * 0.05
    bb = jax.random.normal(kc, (Nout,), jnp.float32)
    yb = _linear_pallas(xb, wb, bb, k_tile=128)
    jax.block_until_ready(yb)
    refb = xb @ wb + bb
    assert yb.shape == refb.shape
    assert jnp.allclose(yb, refb, atol=1e-3, rtol=1e-3)

    print("KERNEL_OK")
</pallas_src>

<mosaic_0001>
module attributes {stable_mosaic.version = 11 : i64} {
  func.func @_linear_kernel(%arg0: i32, %arg1: memref<8x128xf32, #tpu.memory_space<vmem>>, %arg2: memref<128x256xf32, #tpu.memory_space<vmem>>, %arg3: memref<1x256xf32, #tpu.memory_space<vmem>>, %arg4: memref<8x256xf32, #tpu.memory_space<vmem>>) attributes {dimension_semantics = [#tpu.dimension_semantics<parallel>], iteration_bounds = array<i64: 2>, scalar_prefetch = 0 : i64, scratch_operands = 0 : i64, tpu.core_type = #tpu.core_type<tc>, window_params = [{transform_indices = @transform_0, window_bounds = array<i64: 8, 128>}, {pipeline_mode = #tpu.pipeline_mode<synchronous>, transform_indices = @transform_1, window_bounds = array<i64: 128, 256>}, {pipeline_mode = #tpu.pipeline_mode<synchronous>, transform_indices = @transform_2, window_bounds = array<i64: 1, 256>}, {transform_indices = @transform_3, window_bounds = array<i64: 8, 256>}]} {
    %c0 = arith.constant 0 : index
    %c0_0 = arith.constant 0 : index
    %0 = vector.load %arg1[%c0, %c0_0] : memref<8x128xf32, #tpu.memory_space<vmem>>, vector<8x128xf32>
    %c0_1 = arith.constant 0 : index
    %c0_2 = arith.constant 0 : index
    %1 = vector.load %arg2[%c0_1, %c0_2] : memref<128x256xf32, #tpu.memory_space<vmem>>, vector<128x256xf32>
    %cst = arith.constant dense<0.000000e+00> : vector<8x256xf32>
    %2 = tpu.matmul %0, %1, %cst {dimension_numbers = #tpu.dot_dimension_numbers<[1], [0], [0], [1], [0, 0, 1, 1], [], []>} : vector<8x128xf32>, vector<128x256xf32>, vector<8x256xf32> -> vector<8x256xf32>
    %c0_3 = arith.constant 0 : index
    %c0_4 = arith.constant 0 : index
    %3 = vector.load %arg3[%c0_3, %c0_4] : memref<1x256xf32, #tpu.memory_space<vmem>>, vector<1x256xf32>
    %4 = vector.broadcast %3 : vector<1x256xf32> to vector<8x256xf32>
    %5 = arith.addf %2, %4 : vector<8x256xf32>
    %c0_5 = arith.constant 0 : index
    %c0_6 = arith.constant 0 : index
    %6 = vector.load %arg4[%c0_5, %c0_6] : memref<8x256xf32, #tpu.memory_space<vmem>>, vector<8x256xf32>
    tpu.vector_store %arg4[%c0_5, %c0_6], %5 {strides = array<i32>} : memref<8x256xf32, #tpu.memory_space<vmem>>, vector<8x256xf32>,
    return
  }
  func.func @transform_0(%arg0: i32) -> (i32, i32) {
    %c0_i32 = arith.constant 0 : i32
    %c0_i32_0 = arith.constant 0 : i32
    return %arg0, %c0_i32 : i32, i32
  }
  func.func @transform_1(%arg0: i32) -> (i32, i32) {
    %c0_i32 = arith.constant 0 : i32
    %c0_i32_0 = arith.constant 0 : i32
    %c0_i32_1 = arith.constant 0 : i32
    return %c0_i32, %c0_i32_0 : i32, i32
  }
  func.func @transform_2(%arg0: i32) -> (i32, i32) {
    %c0_i32 = arith.constant 0 : i32
    %c0_i32_0 = arith.constant 0 : i32
    %c0_i32_1 = arith.constant 0 : i32
    return %c0_i32, %c0_i32_0 : i32, i32
  }
  func.func @transform_3(%arg0: i32) -> (i32, i32) {
    %c0_i32 = arith.constant 0 : i32
    %c0_i32_0 = arith.constant 0 : i32
    return %arg0, %c0_i32 : i32, i32
  }
}

</mosaic_0001>

<llo_original>
// kernel: linear_patch_decoder_forward.1
$region0: #{linear_patch_decoder_forward.1}
  #allocation0 [shape = 'u32[]', space=smem, size = 0x4, offset = 0x4, fixed_abs, tag = 'smem constant byte address 0x4 - core index']
  #allocation1 [shape = 'u32[144,128]{1,0:T(1,128)}', space=vmem, size = 0x12000, scoped, tag = 'internal scratch']
  %s0 = inlined_call_operand.hbm [shape: f32[16,128], index: 0, kind: input, shape index: {}]
  %s1 = inlined_call_operand.hbm [shape: f32[128,256], index: 1, kind: input, shape index: {}]
  %s2 = inlined_call_operand.vmem [shape: f32[1,256], index: 2, kind: input, shape index: {}]
  %s3 = inlined_call_operand.vmem [shape: f32[16,256], index: 3, kind: output, shape index: {}]
  %s4 = sld [smem:[#allocation0]]
  $region53: #{linear_patch_decoder_forward.1} parent=0
    _
  %s6 = ssub.s32 1, %s4
  %s7 = scalar_select 0, %s6, %s4
  $region1: #{linear_patch_decoder_forward.1} parent=0
    #allocation2 [shape = 'u8[8192]{0}', space=vmem, size = 0x2000, scoped, tag = 'input window, operand 0']
    #allocation3 [shape = 's32[2]{0}', space=sflag, size = 0x8, scoped, tag = 'scoped memory for linear_patch_decoder_forward.1']
    #allocation4 [shape = 'u8[131072]{0}', space=vmem, size = 0x20000, scoped, tag = 'input window, operand 1, single buffered']
    #allocation5 [shape = 's32[1]{0}', space=sflag, size = 0x4, scoped, tag = 'scoped memory for linear_patch_decoder_forward.1']
    %8 = vsyncpa [#allocation3], 0
    %s9 = scalar_lea.sflag [#allocation3], 1
    %10 = vsyncpa %s9, 0
    %11 = vsyncpa [#allocation5], 0
    loop: start=0, step=1, limit=4
    $region2: #{linear_patch_decoder_forward.1} parent=1 // loop_pre_header
      _
    $region3: #{linear_patch_decoder_forward.1} parent=1 // loop_header
      %s13 = sphi 0, %s17
      %p14 = scmp.ge.s32.totalorder %s13, 4
      %s23 = sphi 0, %s25
      %s26 = sphi 0, %s23
      %s27 = sphi 0, %s26
      %s43 = sphi 0, %s27
      %s47 = sphi 0, %s47
      %s49 = sphi 0, %s47
      %s50 = sphi 0, %s49
      %s64 = sphi 0, %s50
      %s68 = sphi 0, %s68
      %s70 = sphi 0, %s68
      %s71 = sphi 0, %s70
      %s85 = sphi 0, %s71
      %s91 = sphi 0, %s93
      %s94 = sphi 0, %s91
      %s95 = sphi 0, %s94
      %s111 = sphi 0, %s95
    $region4: #{linear_patch_decoder_forward.1} parent=1 // loop_header_branch
      %16 = sbr.rel (%p14) target = $region8
    $region5: #{linear_patch_decoder_forward.1} parent=1 // loop_body
      %s18 = ssub.s32 %s13, 1
      %s19 = ssub.s32 %s13, 2
      %s20 = sadd.s32 %s13, 1
      %s21 = ssub.s32 %s13, %s20
      %p22 = scmp.eq.s32.totalorder %s21, 0
      %s24 = sadd.s32 %s23, 1
      %s25 = scalar_select %p22, %s23, %s24
      %p28 = pneg %p22
      %p29 = scmp.eq.s32.totalorder %s13, 1
      %p30 = por %p28, %p29
      %p31 = scmp.ne.s32.totalorder %s23, %s26
      %p32 = scmp.eq.s32.totalorder %s13, 0
      %p33 = por %p31, %p32
      %p34 = scmp.ne.s32.totalorder %s23, %s26
      %p35 = scmp.eq.s32.totalorder %s18, 1
      %p36 = por %p34, %p35
      %p37 = scmp.ne.s32.totalorder %s26, %s27
      %p38 = scmp.eq.s32.totalorder %s18, 0
      %p39 = por %p37, %p38
      %p40 = scmp.ne.s32.totalorder %s26, %s27
      %p41 = scmp.eq.s32.totalorder %s19, 1
      %p42 = por %p40, %p41
      %p44 = scmp.ne.s32.totalorder %s27, %s43
      %p45 = scmp.eq.s32.totalorder %s19, 0
      %p46 = por %p44, %p45
      %s48 = sadd.s32 %s47, 1
      %p51 = scmp.eq.s32.totalorder %s13, 1
      %p52 = scmp.ne.s32.totalorder %s47, %s49
      %p53 = scmp.eq.s32.totalorder %s13, 0
      %p54 = por %p52, %p53
      %p55 = scmp.ne.s32.totalorder %s47, %s49
      %p56 = scmp.eq.s32.totalorder %s18, 1
      %p57 = por %p55, %p56
      %p58 = scmp.ne.s32.totalorder %s49, %s50
      %p59 = scmp.eq.s32.totalorder %s18, 0
      %p60 = por %p58, %p59
      %p61 = scmp.ne.s32.totalorder %s49, %s50
      %p62 = scmp.eq.s32.totalorder %s19, 1
      %p63 = por %p61, %p62
      %p65 = scmp.ne.s32.totalorder %s50, %s64
      %p66 = scmp.eq.s32.totalorder %s19, 0
      %p67 = por %p65, %p66
      %s69 = sadd.s32 %s68, 1
      %p72 = scmp.eq.s32.totalorder %s13, 1
      %p73 = scmp.ne.s32.totalorder %s68, %s70
      %p74 = scmp.eq.s32.totalorder %s13, 0
      %p75 = por %p73, %p74
      %p76 = scmp.ne.s32.totalorder %s68, %s70
      %p77 = scmp.eq.s32.totalorder %s18, 1
      %p78 = por %p76, %p77
      %p79 = scmp.ne.s32.totalorder %s70, %s71
      %p80 = scmp.eq.s32.totalorder %s18, 0
      %p81 = por %p79, %p80
      %p82 = scmp.ne.s32.totalorder %s70, %s71
      %p83 = scmp.eq.s32.totalorder %s19, 1
      %p84 = por %p82, %p83
      %p86 = scmp.ne.s32.totalorder %s71, %s85
      %p87 = scmp.eq.s32.totalorder %s19, 0
      %p88 = por %p86, %p87
      %s89 = ssub.s32 %s13, %s20
      %p90 = scmp.eq.s32.totalorder %s89, 0
      %s92 = sadd.s32 %s91, 1
      %s93 = scalar_select %p90, %s91, %s92
      %p96 = pneg %p90
      %p97 = scmp.eq.s32.totalorder %s13, 1
      %p98 = por %p96, %p97
      %p99 = scmp.ne.s32.totalorder %s91, %s94
      %p100 = scmp.eq.s32.totalorder %s13, 0
      %p101 = por %p99, %p100
      %p102 = scmp.ne.s32.totalorder %s91, %s94
      %p103 = scmp.eq.s32.totalorder %s18, 1
      %p104 = por %p102, %p103
      %p105 = scmp.ne.s32.totalorder %s94, %s95
      %p106 = scmp.eq.s32.totalorder %s18, 0
      %p107 = por %p105, %p106
      %p108 = scmp.ne.s32.totalorder %s94, %s95
      %p109 = scmp.eq.s32.totalorder %s19, 1
      %p110 = por %p108, %p109
      %p112 = scmp.ne.s32.totalorder %s95, %s111
      %p113 = scmp.eq.s32.totalorder %s19, 0
      %p114 = por %p112, %p113
      %p115 = scmp.le.s32.totalorder 1, %s13
      %p116 = scmp.lt.s32.totalorder %s13, 3
      %p117 = pnand %p115, %p116
      %p118 = pneg %p117
      // Predicated region
      $region9: #{linear_patch_decoder_forward.1} parent=5 // pred_check
        _
      $region10: #{linear_patch_decoder_forward.1} parent=5 // pred_check_branch
        %120 = sbr.rel (%p117) target = $region12
      $region11: #{linear_patch_decoder_forward.1} parent=5 // pred_region
        %s121 = ssub.s32 %s13, 1
        // Predicated region
        $region13: #{linear_patch_decoder_forward.1} parent=11 // pred_check
          %p122 = pneg %p60
        $region14: #{linear_patch_decoder_forward.1} parent=11 // pred_check_branch
          %124 = sbr.rel (%p122) target = $region16
        $region15: #{linear_patch_decoder_forward.1} parent=11 // pred_region
          %s126 = ssub.s32 4096, 4096
          %127 = vsyncadd [#allocation5], %s126
          %s128 = sshll.u32 [#allocation4], 4
          %s129 = int_to_ptr.vmem [resolvable:$true] %s128
          %134 = dma.hbm_to_vmem [thread:$0]  %s1, 4096, %s129, [#allocation5], 256, 256, 16
        $region16: #{linear_patch_decoder_forward.1} parent=11 // pred_fallthru
          _
        // Predicated region
        $region17: #{linear_patch_decoder_forward.1} parent=11 // pred_check
          %p135 = pneg %p81
        $region18: #{linear_patch_decoder_forward.1} parent=11 // pred_check_branch
          %137 = sbr.rel (%p135) target = $region20
        $region19: #{linear_patch_decoder_forward.1} parent=11 // pred_region
          _
        $region20: #{linear_patch_decoder_forward.1} parent=11 // pred_fallthru
          _
      $region12: #{linear_patch_decoder_forward.1} parent=5 // pred_fallthru
        _
      %p138 = scmp.lt.s32.totalorder %s13, 2
      // Predicated region
      $region21: #{linear_patch_decoder_forward.1} parent=5 // pred_check
        %p139 = pneg %p138
      $region22: #{linear_patch_decoder_forward.1} parent=5 // pred_check_branch
        %141 = sbr.rel (%p139) target = $region24
      $region23: #{linear_patch_decoder_forward.1} parent=5 // pred_region
        // Predicated region
        $region25: #{linear_patch_decoder_forward.1} parent=23 // pred_check
          %p142 = pneg %p33
        $region26: #{linear_patch_decoder_forward.1} parent=23 // pred_check_branch
          %144 = sbr.rel (%p142) target = $region28
        $region27: #{linear_patch_decoder_forward.1} parent=23 // pred_region
          %s145 = sand.u32 %s23, 1
          %s146 = scalar_lea.sflag [#allocation3], %s145
          %s147 = sand.u32 %s23, 1
          %s148 = smul.addr %s147, 8
          %s149 = scalar_lea.vmem [#allocation2], %s148
          %s151 = ssub.s32 128, 128
          %152 = vsyncadd %s146, %s151
          %s153 = smul.addr %s13, 128
          %s154 = scalar_lea.hbm %s0, %s153
          %s156 = sshll.u32 %s149, 4
          %s157 = int_to_ptr.vmem [resolvable:$true] %s156
          %159 = dma.hbm_to_vmem [thread:$0]  %s154, 128, %s157, %s146
        $region28: #{linear_patch_decoder_forward.1} parent=23 // pred_fallthru
          _
      $region24: #{linear_patch_decoder_forward.1} parent=5 // pred_fallthru
        _
      %p160 = scmp.le.s32.totalorder 1, %s13
      %p161 = scmp.lt.s32.totalorder %s13, 3
      %p162 = pnand %p160, %p161
      %p163 = pneg %p162
      // Predicated region
      $region29: #{linear_patch_decoder_forward.1} parent=5 // pred_check
        _
      $region30: #{linear_patch_decoder_forward.1} parent=5 // pred_check_branch
        %165 = sbr.rel (%p162) target = $region32
      $region31: #{linear_patch_decoder_forward.1} parent=5 // pred_region
        %s166 = ssub.s32 %s13, 1
        %s167 = sand.u32 %s26, 1
        %s168 = scalar_lea.sflag [#allocation3], %s167
        %s169 = sand.u32 %s26, 1
        %s170 = smul.addr %s169, 8
        %s171 = scalar_lea.vmem [#allocation2], %s170
        // Predicated region
        $region33: #{linear_patch_decoder_forward.1} parent=31 // pred_check
          %p172 = pneg %p39
        $region34: #{linear_patch_decoder_forward.1} parent=31 // pred_check_branch
          %174 = sbr.rel (%p172) target = $region36
        $region35: #{linear_patch_decoder_forward.1} parent=31 // pred_region
          %175 = dma.done %s168, 128
        $region36: #{linear_patch_decoder_forward.1} parent=31 // pred_fallthru
          _
        // Predicated region
        $region37: #{linear_patch_decoder_forward.1} parent=31 // pred_check
          %p176 = pneg %p60
        $region38: #{linear_patch_decoder_forward.1} parent=31 // pred_check_branch
          %178 = sbr.rel (%p176) target = $region40
        $region39: #{linear_patch_decoder_forward.1} parent=31 // pred_region
          %179 = dma.done [#allocation5], 4096
        $region40: #{linear_patch_decoder_forward.1} parent=31 // pred_fallthru
          _
        %s180 = sand.u32 %s26, 1
        %s181 = scalar_lea.sflag [#allocation3], %s180
        %s182 = sand.u32 %s26, 1
        %s183 = smul.addr %s182, 8
        %s184 = scalar_lea.vmem [#allocation2], %s183
        %p185 = pneg %p39
        %p186 = pneg %p36
        %p187 = pneg %p60
        %p188 = pneg %p57
        %p189 = pneg %p81
        %p190 = pneg %p78
        %p191 = pneg %p107
        %p192 = pneg %p104
        %p193 = scmp.lt.s32.totalorder %s18, 1
        %s194 = scalar_select %p193, %s18, 1
        %s195 = smul.addr %s194, 2
        %s196 = smul.addr %s195, 8
        %s197 = scalar_lea.vmem %s3, %s196
        %p198 = scmp.lt.s32.totalorder %s18, 1
        %s199 = scalar_select %p198, %s18, 1
        %s200 = smul.addr %s199, 2
        %s201 = smul.addr %s200, 8
        %s202 = scalar_lea.vmem %s3, %s201
        %v203 = vld [vmem:[%s171] sm:$0xff]
        %v204 = vld [vmem:[#allocation4] sm:$0xff]
        %v205 = vld [vmem:[#allocation4 + $0x8] sm:$0xff]
        %v206 = vld [vmem:[#allocation4 + $0x10] sm:$0xff]
        %v207 = vld [vmem:[#allocation4 + $0x18] sm:$0xff]
        %v208 = vld [vmem:[#allocation4 + $0x20] sm:$0xff]
        %v209 = vld [vmem:[#allocation4 + $0x28] sm:$0xff]
        %v210 = vld [vmem:[#allocation4 + $0x30] sm:$0xff]
        %v211 = vld [vmem:[#allocation4 + $0x38] sm:$0xff]
        %v212 = vld [vmem:[#allocation4 + $0x40] sm:$0xff]
        %v213 = vld [vmem:[#allocation4 + $0x48] sm:$0xff]
        %v214 = vld [vmem:[#allocation4 + $0x50] sm:$0xff]
        %v215 = vld [vmem:[#allocation4 + $0x58] sm:$0xff]
        %v216 = vld [vmem:[#allocation4 + $0x60] sm:$0xff]
        %v217 = vld [vmem:[#allocation4 + $0x68] sm:$0xff]
        %v218 = vld [vmem:[#allocation4 + $0x70] sm:$0xff]
        %v219 = vld [vmem:[#allocation4 + $0x78] sm:$0xff]
        %v220 = vld [vmem:[#allocation4 + $0x80] sm:$0xff]
        %v221 = vld [vmem:[#allocation4 + $0x88] sm:$0xff]
        %v222 = vld [vmem:[#allocation4 + $0x90] sm:$0xff]
        %v223 = vld [vmem:[#allocation4 + $0x98] sm:$0xff]
        %v224 = vld [vmem:[#allocation4 + $0xa0] sm:$0xff]
        %v225 = vld [vmem:[#allocation4 + $0xa8] sm:$0xff]
        %v226 = vld [vmem:[#allocation4 + $0xb0] sm:$0xff]
        %v227 = vld [vmem:[#allocation4 + $0xb8] sm:$0xff]
        %v228 = vld [vmem:[#allocation4 + $0xc0] sm:$0xff]
        %v229 = vld [vmem:[#allocation4 + $0xc8] sm:$0xff]
        %v230 = vld [vmem:[#allocation4 + $0xd0] sm:$0xff]
        %v231 = vld [vmem:[#allocation4 + $0xd8] sm:$0xff]
        %v232 = vld [vmem:[#allocation4 + $0xe0] sm:$0xff]
        %v233 = vld [vmem:[#allocation4 + $0xe8] sm:$0xff]
        %v234 = vld [vmem:[#allocation4 + $0xf0] sm:$0xff]
        %v235 = vld [vmem:[#allocation4 + $0xf8] sm:$0xff]
        %v236 = vld [vmem:[%s2] sm:$0x3]
        %v238 = vlaneseq
        %v239 = vshrl.u32 %v238, 7
        %v240 = vsub.s32 0, %v239
        %v241 = vrot.slane %v236, %v240
        %v242 = vlaneseq
        %v243 = vshrl.u32 %v242, 7
        %v244 = vsub.s32 1, %v243
        %v245 = vrot.slane %v236, %v244
        %248 = vmatprep.subr.mxu0 %v205
        %249 = vmatpush1.msra.mxu0 %v204
        %250 = vmatprep.subr.mxu0 %v207
        %251 = vmatpush1.msra.mxu0 %v206
        %252 = vmatprep.subr.mxu0 %v209
        %253 = vmatpush1.msra.mxu0 %v208
        %254 = vmatprep.subr.mxu0 %v211
        %255 = vmatpush1.msra.mxu0 %v210
        %256 = vmatprep.subr.mxu0 %v213
        %257 = vmatpush1.msra.mxu0 %v212
        %258 = vmatprep.subr.mxu0 %v215
        %259 = vmatpush1.msra.mxu0 %v214
        %260 = vmatprep.subr.mxu0 %v217
        %261 = vmatpush1.msra.mxu0 %v216
        %262 = vmatprep.subr.mxu0 %v219
        %263 = vmatpush1.msra.mxu0 %v218
        %264 = vmatprep.subr.mxu0 %v221
        %265 = vmatpush1.msra.mxu0 %v220
        %266 = vmatprep.subr.mxu0 %v223
        %267 = vmatpush1.msra.mxu0 %v222
        %268 = vmatprep.subr.mxu0 %v225
        %269 = vmatpush1.msra.mxu0 %v224
        %270 = vmatprep.subr.mxu0 %v227
        %271 = vmatpush1.msra.mxu0 %v226
        %272 = vmatprep.subr.mxu0 %v229
        %273 = vmatpush1.msra.mxu0 %v228
        %274 = vmatprep.subr.mxu0 %v231
        %275 = vmatpush1.msra.mxu0 %v230
        %276 = vmatprep.subr.mxu0 %v233
        %277 = vmatpush1.msra.mxu0 %v232
        %278 = vmatprep.subr.mxu0 %v235
        %279 = vmatpush1.msra.mxu0 %v234
        %280 = vmatprep.subr.mxu0 0.0
        %281 = vmatpush1.msra.mxu0 0.0
        %282 = vmatprep.subr.mxu0 0.0
        %283 = vmatpush1.msra.mxu0 0.0
        %284 = vmatprep.subr.mxu0 0.0
        %285 = vmatpush1.msra.mxu0 0.0
        %286 = vmatprep.subr.mxu0 0.0
        %287 = vmatpush1.msra.mxu0 0.0
        %288 = vmatprep.subr.mxu0 0.0
        %289 = vmatpush1.msra.mxu0 0.0
        %290 = vmatprep.subr.mxu0 0.0
        %291 = vmatpush1.msra.mxu0 0.0
        %292 = vmatprep.subr.mxu0 0.0
        %293 = vmatpush1.msra.mxu0 0.0
        %294 = vmatprep.subr.mxu0 0.0
        %295 = vmatpush1.msra.mxu0 0.0
        %296 = vmatprep.subr.mxu0 0.0
        %297 = vmatpush1.msra.mxu0 0.0
        %298 = vmatprep.subr.mxu0 0.0
        %299 = vmatpush1.msra.mxu0 0.0
        %300 = vmatprep.subr.mxu0 0.0
        %301 = vmatpush1.msra.mxu0 0.0
        %302 = vmatprep.subr.mxu0 0.0
        %303 = vmatpush1.msra.mxu0 0.0
        %304 = vmatprep.subr.mxu0 0.0
        %305 = vmatpush1.msra.mxu0 0.0
        %306 = vmatprep.subr.mxu0 0.0
        %307 = vmatpush1.msra.mxu0 0.0
        %308 = vmatprep.subr.mxu0 0.0
        %309 = vmatpush1.msra.mxu0 0.0
        %310 = vmatprep.subr.mxu0 0.0
        %311 = vmatpush1.msra.mxu0 0.0
        %312 = vmatprep.mubr.f32.mxu0 0.0
        %313 = vmatmul.mubr.f32.gmra.mrb[0].mxu0 %v203
        %v314 = vpop.f32.mrb[0].mxu0
        %v315 = vadd.f32 %v241, %v314
        %v316 = vpop.f32.mrb[0].mxu0
        %v317 = vadd.f32 %v245, %v316
        %318 = vdwg.mxu0
        %319 = vst [vmem:[%s202] sm:$0xff] %v315
        %320 = vst [vmem:[%s202 + $0x8] sm:$0xff] %v317
        %p321 = scmp.lt.s32.totalorder %s18, 1
        %s322 = scalar_select %p321, %s18, 1
        %s323 = smul.addr %s322, 2
        %s324 = smul.addr %s323, 8
        %s325 = scalar_lea.vmem %s3, %s324
        // Predicated region
        $region41: #{linear_patch_decoder_forward.1} parent=31 // pred_check
          %p326 = pneg %p104
        $region42: #{linear_patch_decoder_forward.1} parent=31 // pred_check_branch
          %328 = sbr.rel (%p326) target = $region44
        $region43: #{linear_patch_decoder_forward.1} parent=31 // pred_region
          _
        $region44: #{linear_patch_decoder_forward.1} parent=31 // pred_fallthru
          _
      $region32: #{linear_patch_decoder_forward.1} parent=5 // pred_fallthru
        _
      %p329 = scmp.le.s32.totalorder 2, %s13
      // Predicated region
      $region45: #{linear_patch_decoder_forward.1} parent=5 // pred_check
        %p330 = pneg %p329
      $region46: #{linear_patch_decoder_forward.1} parent=5 // pred_check_branch
        %332 = sbr.rel (%p330) target = $region48
      $region47: #{linear_patch_decoder_forward.1} parent=5 // pred_region
        %s333 = ssub.s32 %s13, 2
        // Predicated region
        $region49: #{linear_patch_decoder_forward.1} parent=47 // pred_check
          %p334 = pneg %p110
        $region50: #{linear_patch_decoder_forward.1} parent=47 // pred_check_branch
          %336 = sbr.rel (%p334) target = $region52
        $region51: #{linear_patch_decoder_forward.1} parent=47 // pred_region
          %p337 = scmp.lt.s32.totalorder %s19, 1
          %s338 = scalar_select %p337, %s19, 1
          %s339 = smul.addr %s338, 2
          %s340 = smul.addr %s339, 8
          %s341 = scalar_lea.vmem %s3, %s340
        $region52: #{linear_patch_decoder_forward.1} parent=47 // pred_fallthru
          _
      $region48: #{linear_patch_decoder_forward.1} parent=5 // pred_fallthru
        _
    $region6: #{linear_patch_decoder_forward.1} parent=1 // loop_footer
      %s17 = sadd.s32 1, %s13
    $region7: #{linear_patch_decoder_forward.1} parent=1 // loop_footer_branch
      %12 = sbr.rel target = $region3
    $region8: #{linear_patch_decoder_forward.1} parent=1 // loop_exit
      _
    %342 = vsyncpa [#allocation3], 1
    %s343 = scalar_lea.sflag [#allocation3], 1
    %344 = vsyncpa %s343, 1
    %345 = vsyncpa [#allocation5], 1

</llo_original>
